<compile_context>
chip_gen: v5e
topology: v5e:2x2
jax: 0.10.0
libtpu: 0.0.40
codegen_flags: <defaults>
</compile_context>

<pallas_src>
import jax
import jax.numpy as jnp
from jax import lax
from jax.experimental import pallas as pl
from jax.experimental.pallas import tpu as pltpu


def fc_kernel(x_ref, w_ref, b_ref, o_ref):
    # x_ref: (B, K) fp32, w_ref: (Npad, K) fp32, b_ref: (1, Npad) fp32
    # y = x @ w.T + b  (contraction over K, which is the last dim of BOTH
    # operands -> no transpose materialized anywhere).
    y = lax.dot_general(
        x_ref[...], w_ref[...],
        dimension_numbers=(((1,), (1,)), ((), ())),
        preferred_element_type=jnp.float32,
    )
    o_ref[...] = (y + b_ref[...]).astype(o_ref.dtype)


def toy_model_forward(x_nchw, w, b, *, n_pad=128):
    """x_nchw: (B, 3, 32, 32) f32; w: (10, 3072) f32; b: (10,) f32 -> (B, 10)."""
    B = x_nchw.shape[0]
    N, K = w.shape                    # (10, 3072)
    assert n_pad >= N and n_pad % 128 == 0

    # Same semantics as torch .view(B, -1): row-major flatten of NCHW.
    x_flat = x_nchw.reshape(B, K)

    # Pad the output dim to a full 128-lane width (free MXU compute,
    # unmasked vector stores). K stays the last (contiguous) dim of w.
    w_pad = jnp.zeros((n_pad, K), jnp.float32).at[:N, :].set(w)
    b_pad = jnp.zeros((1, n_pad), jnp.float32).at[0, :N].set(b)

    bytes_accessed = 4 * (B * K + n_pad * K + n_pad + B * n_pad)

    y_pad = pl.pallas_call(
        fc_kernel,
        out_shape=jax.ShapeDtypeStruct((B, n_pad), jnp.float32),
        in_specs=[
            pl.BlockSpec(memory_space=pltpu.MemorySpace.VMEM),   # x  (B, K)
            pl.BlockSpec(memory_space=pltpu.MemorySpace.VMEM),   # w  (Npad, K)
            pl.BlockSpec(memory_space=pltpu.MemorySpace.VMEM),   # b  (1, Npad)
        ],
        out_specs=pl.BlockSpec(memory_space=pltpu.MemorySpace.VMEM),
        cost_estimate=pl.CostEstimate(
            flops=2 * B * K * n_pad,
            transcendentals=0,
            bytes_accessed=bytes_accessed,
        ),
    )(x_flat, w_pad, b_pad)

    return y_pad[:, :N]


def init_params(key, in_features=3 * 32 * 32, num_classes=10):
    # Deterministic init mimicking torch.nn.Linear default (uniform +-1/sqrt(fan_in)).
    kw, kb = jax.random.split(key)
    bound = 1.0 / jnp.sqrt(jnp.float32(in_features))
    w = jax.random.uniform(kw, (num_classes, in_features), jnp.float32, -bound, bound)
    b = jax.random.uniform(kb, (num_classes,), jnp.float32, -bound, bound)
    return w, b


if __name__ == "__main__":
    key = jax.random.PRNGKey(0)
    kx, kp = jax.random.split(key)

    # Input consistent with fc = Linear(3*32*32, 10): NCHW (B=2, C=3, H=32, W=32).
    x = jax.random.normal(kx, (2, 3, 32, 32), jnp.float32)
    w, b = init_params(kp)

    # TODO(synk): stem_conv / ConvBrunch blocks / self.f are never used in
    # ToyModel.forward, so they are intentionally not implemented here.
    y = toy_model_forward(x, w, b)
    jax.block_until_ready(y)

    # Reference check in plain JAX (same math as torch Linear, fp32).
    y_ref = x.reshape(2, -1) @ w.T + b
    assert y.shape == (2, 10)
    assert jnp.allclose(y, y_ref, atol=1e-4, rtol=1e-4), "mismatch vs reference"

    print("KERNEL_OK")
</pallas_src>

<mosaic_0001>
module attributes {stable_mosaic.version = 11 : i64} {
  func.func @fc_kernel(%arg0: memref<2x3072xf32, #tpu.memory_space<vmem>>, %arg1: memref<128x3072xf32, #tpu.memory_space<vmem>>, %arg2: memref<1x128xf32, #tpu.memory_space<vmem>>, %arg3: memref<2x128xf32, #tpu.memory_space<vmem>>) attributes {dimension_semantics = [], scalar_prefetch = 0 : i64, scratch_operands = 0 : i64, tpu.core_type = #tpu.core_type<tc>} {
    %c0 = arith.constant 0 : index
    %c0_0 = arith.constant 0 : index
    %0 = vector.load %arg0[%c0, %c0_0] : memref<2x3072xf32, #tpu.memory_space<vmem>>, vector<2x3072xf32>
    %c0_1 = arith.constant 0 : index
    %c0_2 = arith.constant 0 : index
    %1 = vector.load %arg1[%c0_1, %c0_2] : memref<128x3072xf32, #tpu.memory_space<vmem>>, vector<128x3072xf32>
    %cst = arith.constant dense<0.000000e+00> : vector<2x128xf32>
    %2 = tpu.matmul %0, %1, %cst {dimension_numbers = #tpu.dot_dimension_numbers<[1], [1], [0], [0], [0, 0, 1, 0], [], []>} : vector<2x3072xf32>, vector<128x3072xf32>, vector<2x128xf32> -> vector<2x128xf32>
    %c0_3 = arith.constant 0 : index
    %c0_4 = arith.constant 0 : index
    %3 = vector.load %arg2[%c0_3, %c0_4] : memref<1x128xf32, #tpu.memory_space<vmem>>, vector<1x128xf32>
    %4 = vector.broadcast %3 : vector<1x128xf32> to vector<2x128xf32>
    %5 = arith.addf %2, %4 : vector<2x128xf32>
    %c0_5 = arith.constant 0 : index
    %c0_6 = arith.constant 0 : index
    %6 = vector.load %arg3[%c0_5, %c0_6] : memref<2x128xf32, #tpu.memory_space<vmem>>, vector<2x128xf32>
    tpu.vector_store %arg3[%c0_5, %c0_6], %5 {strides = array<i32>} : memref<2x128xf32, #tpu.memory_space<vmem>>, vector<2x128xf32>,
    return
  }
}

</mosaic_0001>

<llo_original>
// kernel: tpu_custom_call.1
$region0: #{tpu_custom_call.1}
  #allocation0 [shape = 'u32[]', space=smem, size = 0x4, offset = 0x4, fixed_abs, tag = 'smem constant byte address 0x4 - core index']
  #allocation1 [shape = 'u32[72,128]{1,0:T(1,128)}', space=vmem, size = 0x9000, scoped, tag = 'internal scratch']
  %s0 = inlined_call_operand.hbm [shape: f32[2,3072], index: 0, kind: input, shape index: {}]
  %s1 = inlined_call_operand.hbm [shape: f32[128,3072], index: 1, kind: input, shape index: {}]
  %s2 = inlined_call_operand.hbm [shape: f32[1,128], index: 2, kind: input, shape index: {}]
  %s3 = inlined_call_operand.hbm [shape: f32[2,128], index: 3, kind: output, shape index: {}]
  %s4 = sld [smem:[#allocation0]]
  $region34: #{tpu_custom_call.1} parent=0
    _
  %s6 = ssub.s32 1, %s4
  %s7 = scalar_select 0, %s6, %s4
  $region1: #{tpu_custom_call.1} parent=0
    #allocation2 [shape = 'u8[24576]{0}', space=vmem, size = 0x6000, scoped, tag = 'input window, operand 0, single buffered']
    #allocation3 [shape = 's32[1]{0}', space=sflag, size = 0x4, scoped, tag = 'scoped memory for tpu_custom_call.1']
    #allocation4 [shape = 's32[1]{0}', space=sflag, size = 0x4, scoped, tag = 'scoped memory for tpu_custom_call.1']
    #allocation5 [shape = 'u8[1572864]{0}', space=vmem, size = 0x180000, scoped, tag = 'input window, operand 1, single buffered']
    #allocation6 [shape = 's32[1]{0}', space=sflag, size = 0x4, scoped, tag = 'scoped memory for tpu_custom_call.1']
    #allocation7 [shape = 'u8[512]{0}', space=vmem, size = 0x400, scoped, tag = 'input window, operand 2, single buffered']
    #allocation8 [shape = 'u8[1024]{0}', space=vmem, size = 0x400, scoped, tag = 'output window, operand 0, single buffered']
    %8 = vsyncpa [#allocation3], 0
    %9 = vsyncpa [#allocation6], 0
    %10 = vsyncpa [#allocation4], 0
    // Predicated region
    $region2: #{tpu_custom_call.1} parent=1 // pred_check
      _
    $region3: #{tpu_custom_call.1} parent=1 // pred_check_branch
      %12 = sbr.rel (0) target = $region5
    $region4: #{tpu_custom_call.1} parent=1 // pred_region
      %14 = vsyncadd [#allocation3], 0
      %s16 = sshll.u32 %s0, 4
      %s17 = int_to_ptr.hbm [resolvable:$true] %s16
      %s18 = sshll.u32 [#allocation2], 4
      %s19 = int_to_ptr.vmem [resolvable:$true] %s18
      %21 = dma.hbm_to_vmem [thread:$0]  %s17, 768, %s19, [#allocation3]
    $region5: #{tpu_custom_call.1} parent=1 // pred_fallthru
      _
    // Predicated region
    $region6: #{tpu_custom_call.1} parent=1 // pred_check
      _
    $region7: #{tpu_custom_call.1} parent=1 // pred_check_branch
      %23 = sbr.rel (0) target = $region9
    $region8: #{tpu_custom_call.1} parent=1 // pred_region
      %25 = vsyncadd [#allocation6], 0
      %s26 = sshll.u32 %s1, 4
      %s27 = int_to_ptr.hbm [resolvable:$true] %s26
      %s28 = sshll.u32 [#allocation5], 4
      %s29 = int_to_ptr.vmem [resolvable:$true] %s28
      %34 = dma.hbm_to_vmem [thread:$0]  %s27, 49152, %s29, [#allocation6], 3072, 3072, 192
    $region9: #{tpu_custom_call.1} parent=1 // pred_fallthru
      _
    // Predicated region
    $region10: #{tpu_custom_call.1} parent=1 // pred_check
      _
    $region11: #{tpu_custom_call.1} parent=1 // pred_check_branch
      %36 = sbr.rel (0) target = $region13
    $region12: #{tpu_custom_call.1} parent=1 // pred_region
      %38 = vsyncadd [#allocation6], 0
      %s40 = sshll.u32 %s2, 4
      %s41 = int_to_ptr.hbm [resolvable:$true] %s40
      %s42 = sshll.u32 [#allocation7], 4
      %s43 = int_to_ptr.vmem [resolvable:$true] %s42
      %45 = dma.hbm_to_vmem [thread:$0]  %s41, 16, %s43, [#allocation6]
    $region13: #{tpu_custom_call.1} parent=1 // pred_fallthru
      _
    // Predicated region
    $region14: #{tpu_custom_call.1} parent=1 // pred_check
      _
    $region15: #{tpu_custom_call.1} parent=1 // pred_check_branch
      %47 = sbr.rel (0) target = $region17
    $region16: #{tpu_custom_call.1} parent=1 // pred_region
      %49 = dma.done [#allocation3], 768
    $region17: #{tpu_custom_call.1} parent=1 // pred_fallthru
      _
    // Predicated region
    $region18: #{tpu_custom_call.1} parent=1 // pred_check
      _
    $region19: #{tpu_custom_call.1} parent=1 // pred_check_branch
      %51 = sbr.rel (0) target = $region21
    $region20: #{tpu_custom_call.1} parent=1 // pred_region
      %53 = dma.done [#allocation6], 49152
    $region21: #{tpu_custom_call.1} parent=1 // pred_fallthru
      _
    // Predicated region
    $region22: #{tpu_custom_call.1} parent=1 // pred_check
      _
    $region23: #{tpu_custom_call.1} parent=1 // pred_check_branch
      %55 = sbr.rel (0) target = $region25
    $region24: #{tpu_custom_call.1} parent=1 // pred_region
      %57 = dma.done [#allocation6], 16
    $region25: #{tpu_custom_call.1} parent=1 // pred_fallthru
      _
    %v58 = vld [vmem:[#allocation2] sm:$0xff]
    %v59 = vld [vmem:[#allocation2 + $0x8] sm:$0xff]
    %v60 = vld [vmem:[#allocation2 + $0x10] sm:$0xff]
    %v61 = vld [vmem:[#allocation2 + $0x18] sm:$0xff]
    %v62 = vld [vmem:[#allocation2 + $0x20] sm:$0xff]
    %v63 = vld [vmem:[#allocation2 + $0x28] sm:$0xff]
    %v64 = vld [vmem:[#allocation5] sm:$0xff]
    %v65 = vld [vmem:[#allocation5 + $0x8] sm:$0xff]
    %v66 = vld [vmem:[#allocation5 + $0x10] sm:$0xff]
    %v67 = vld [vmem:[#allocation5 + $0x18] sm:$0xff]
    %v68 = vld [vmem:[#allocation5 + $0x20] sm:$0xff]
    %v69 = vld [vmem:[#allocation5 + $0x28] sm:$0xff]
    %v70 = vld [vmem:[#allocation5 + $0x30] sm:$0xff]
    %v71 = vld [vmem:[#allocation5 + $0x38] sm:$0xff]
    %v72 = vld [vmem:[#allocation5 + $0x40] sm:$0xff]
    %v73 = vld [vmem:[#allocation5 + $0x48] sm:$0xff]
    %v74 = vld [vmem:[#allocation5 + $0x50] sm:$0xff]
    %v75 = vld [vmem:[#allocation5 + $0x58] sm:$0xff]
    %v76 = vld [vmem:[#allocation5 + $0x60] sm:$0xff]
    %v77 = vld [vmem:[#allocation5 + $0x68] sm:$0xff]
    %v78 = vld [vmem:[#allocation5 + $0x70] sm:$0xff]
    %v79 = vld [vmem:[#allocation5 + $0x78] sm:$0xff]
    %v80 = vld [vmem:[#allocation5 + $0x80] sm:$0xff]
    %v81 = vld [vmem:[#allocation5 + $0x88] sm:$0xff]
    %v82 = vld [vmem:[#allocation5 + $0x90] sm:$0xff]
    %v83 = vld [vmem:[#allocation5 + $0x98] sm:$0xff]
    %v84 = vld [vmem:[#allocation5 + $0xa0] sm:$0xff]
    %v85 = vld [vmem:[#allocation5 + $0xa8] sm:$0xff]
    %v86 = vld [vmem:[#allocation5 + $0xb0] sm:$0xff]
    %v87 = vld [vmem:[#allocation5 + $0xb8] sm:$0xff]
    %v88 = vld [vmem:[#allocation5 + $0xc0] sm:$0xff]
    %v89 = vld [vmem:[#allocation5 + $0xc8] sm:$0xff]
    %v90 = vld [vmem:[#allocation5 + $0xd0] sm:$0xff]
    %v91 = vld [vmem:[#allocation5 + $0xd8] sm:$0xff]
    %v92 = vld [vmem:[#allocation5 + $0xe0] sm:$0xff]
    %v93 = vld [vmem:[#allocation5 + $0xe8] sm:$0xff]
    %v94 = vld [vmem:[#allocation5 + $0xf0] sm:$0xff]
    %v95 = vld [vmem:[#allocation5 + $0xf8] sm:$0xff]
    %v96 = vld [vmem:[#allocation5 + $0x100] sm:$0xff]
    %v97 = vld [vmem:[#allocation5 + $0x108] sm:$0xff]
    %v98 = vld [vmem:[#allocation5 + $0x110] sm:$0xff]
    %v99 = vld [vmem:[#allocation5 + $0x118] sm:$0xff]
    %v100 = vld [vmem:[#allocation5 + $0x120] sm:$0xff]
    %v101 = vld [vmem:[#allocation5 + $0x128] sm:$0xff]
    %v102 = vld [vmem:[#allocation5 + $0x130] sm:$0xff]
    %v103 = vld [vmem:[#allocation5 + $0x138] sm:$0xff]
    %v104 = vld [vmem:[#allocation5 + $0x140] sm:$0xff]
    %v105 = vld [vmem:[#allocation5 + $0x148] sm:$0xff]
    %v106 = vld [vmem:[#allocation5 + $0x150] sm:$0xff]
    %v107 = vld [vmem:[#allocation5 + $0x158] sm:$0xff]
    %v108 = vld [vmem:[#allocation5 + $0x160] sm:$0xff]
    %v109 = vld [vmem:[#allocation5 + $0x168] sm:$0xff]
    %v110 = vld [vmem:[#allocation5 + $0x170] sm:$0xff]
    %v111 = vld [vmem:[#allocation5 + $0x178] sm:$0xff]
    %v112 = vld [vmem:[#allocation5 + $0x180] sm:$0xff]
    %v113 = vld [vmem:[#allocation5 + $0x188] sm:$0xff]
    %v114 = vld [vmem:[#allocation5 + $0x190] sm:$0xff]
    %v115 = vld [vmem:[#allocation5 + $0x198] sm:$0xff]
    %v116 = vld [vmem:[#allocation5 + $0x1a0] sm:$0xff]
    %v117 = vld [vmem:[#allocation5 + $0x1a8] sm:$0xff]
    %v118 = vld [vmem:[#allocation5 + $0x1b0] sm:$0xff]
    %v119 = vld [vmem:[#allocation5 + $0x1b8] sm:$0xff]
    %v120 = vld [vmem:[#allocation5 + $0x1c0] sm:$0xff]
    %v121 = vld [vmem:[#allocation5 + $0x1c8] sm:$0xff]
    %v122 = vld [vmem:[#allocation5 + $0x1d0] sm:$0xff]
    %v123 = vld [vmem:[#allocation5 + $0x1d8] sm:$0xff]
    %v124 = vld [vmem:[#allocation5 + $0x1e0] sm:$0xff]
    %v125 = vld [vmem:[#allocation5 + $0x1e8] sm:$0xff]
    %v126 = vld [vmem:[#allocation5 + $0x1f0] sm:$0xff]
    %v127 = vld [vmem:[#allocation5 + $0x1f8] sm:$0xff]
    %v128 = vld [vmem:[#allocation5 + $0x200] sm:$0xff]
    %v129 = vld [vmem:[#allocation5 + $0x208] sm:$0xff]
    %v130 = vld [vmem:[#allocation5 + $0x210] sm:$0xff]
    %v131 = vld [vmem:[#allocation5 + $0x218] sm:$0xff]
    %v132 = vld [vmem:[#allocation5 + $0x220] sm:$0xff]
    %v133 = vld [vmem:[#allocation5 + $0x228] sm:$0xff]
    %v134 = vld [vmem:[#allocation5 + $0x230] sm:$0xff]
    %v135 = vld [vmem:[#allocation5 + $0x238] sm:$0xff]
    %v136 = vld [vmem:[#allocation5 + $0x240] sm:$0xff]
    %v137 = vld [vmem:[#allocation5 + $0x248] sm:$0xff]
    %v138 = vld [vmem:[#allocation5 + $0x250] sm:$0xff]
    %v139 = vld [vmem:[#allocation5 + $0x258] sm:$0xff]
    %v140 = vld [vmem:[#allocation5 + $0x260] sm:$0xff]
    %v141 = vld [vmem:[#allocation5 + $0x268] sm:$0xff]
    %v142 = vld [vmem:[#allocation5 + $0x270] sm:$0xff]
    %v143 = vld [vmem:[#allocation5 + $0x278] sm:$0xff]
    %v144 = vld [vmem:[#allocation5 + $0x280] sm:$0xff]
    %v145 = vld [vmem:[#allocation5 + $0x288] sm:$0xff]
    %v146 = vld [vmem:[#allocation5 + $0x290] sm:$0xff]
    %v147 = vld [vmem:[#allocation5 + $0x298] sm:$0xff]
    %v148 = vld [vmem:[#allocation5 + $0x2a0] sm:$0xff]
    %v149 = vld [vmem:[#allocation5 + $0x2a8] sm:$0xff]
    %v150 = vld [vmem:[#allocation5 + $0x2b0] sm:$0xff]
    %v151 = vld [vmem:[#allocation5 + $0x2b8] sm:$0xff]
    %v152 = vld [vmem:[#allocation5 + $0x2c0] sm:$0xff]
    %v153 = vld [vmem:[#allocation5 + $0x2c8] sm:$0xff]
    %v154 = vld [vmem:[#allocation5 + $0x2d0] sm:$0xff]
    %v155 = vld [vmem:[#allocation5 + $0x2d8] sm:$0xff]
    %v156 = vld [vmem:[#allocation5 + $0x2e0] sm:$0xff]
    %v157 = vld [vmem:[#allocation5 + $0x2e8] sm:$0xff]
    %v158 = vld [vmem:[#allocation5 + $0x2f0] sm:$0xff]
    %v159 = vld [vmem:[#allocation5 + $0x2f8] sm:$0xff]
    %v160 = vld [vmem:[#allocation5 + $0x300] sm:$0xff]
    %v161 = vld [vmem:[#allocation5 + $0x308] sm:$0xff]
    %v162 = vld [vmem:[#allocation5 + $0x310] sm:$0xff]
    %v163 = vld [vmem:[#allocation5 + $0x318] sm:$0xff]
    %v164 = vld [vmem:[#allocation5 + $0x320] sm:$0xff]
    %v165 = vld [vmem:[#allocation5 + $0x328] sm:$0xff]
    %v166 = vld [vmem:[#allocation5 + $0x330] sm:$0xff]
    %v167 = vld [vmem:[#allocation5 + $0x338] sm:$0xff]
    %v168 = vld [vmem:[#allocation5 + $0x340] sm:$0xff]
    %v169 = vld [vmem:[#allocation5 + $0x348] sm:$0xff]
    %v170 = vld [vmem:[#allocation5 + $0x350] sm:$0xff]
    %v171 = vld [vmem:[#allocation5 + $0x358] sm:$0xff]
    %v172 = vld [vmem:[#allocation5 + $0x360] sm:$0xff]
    %v173 = vld [vmem:[#allocation5 + $0x368] sm:$0xff]
    %v174 = vld [vmem:[#allocation5 + $0x370] sm:$0xff]
    %v175 = vld [vmem:[#allocation5 + $0x378] sm:$0xff]
    %v176 = vld [vmem:[#allocation5 + $0x380] sm:$0xff]
    %v177 = vld [vmem:[#allocation5 + $0x388] sm:$0xff]
    %v178 = vld [vmem:[#allocation5 + $0x390] sm:$0xff]
    %v179 = vld [vmem:[#allocation5 + $0x398] sm:$0xff]
    %v180 = vld [vmem:[#allocation5 + $0x3a0] sm:$0xff]
    %v181 = vld [vmem:[#allocation5 + $0x3a8] sm:$0xff]
    %v182 = vld [vmem:[#allocation5 + $0x3b0] sm:$0xff]
    %v183 = vld [vmem:[#allocation5 + $0x3b8] sm:$0xff]
    %v184 = vld [vmem:[#allocation5 + $0x3c0] sm:$0xff]
    %v185 = vld [vmem:[#allocation5 + $0x3c8] sm:$0xff]
    %v186 = vld [vmem:[#allocation5 + $0x3d0] sm:$0xff]
    %v187 = vld [vmem:[#allocation5 + $0x3d8] sm:$0xff]
    %v188 = vld [vmem:[#allocation5 + $0x3e0] sm:$0xff]
    %v189 = vld [vmem:[#allocation5 + $0x3e8] sm:$0xff]
    %v190 = vld [vmem:[#allocation5 + $0x3f0] sm:$0xff]
    %v191 = vld [vmem:[#allocation5 + $0x3f8] sm:$0xff]
    %v192 = vld [vmem:[#allocation5 + $0x400] sm:$0xff]
    %v193 = vld [vmem:[#allocation5 + $0x408] sm:$0xff]
    %v194 = vld [vmem:[#allocation5 + $0x410] sm:$0xff]
    %v195 = vld [vmem:[#allocation5 + $0x418] sm:$0xff]
    %v196 = vld [vmem:[#allocation5 + $0x420] sm:$0xff]
    %v197 = vld [vmem:[#allocation5 + $0x428] sm:$0xff]
    %v198 = vld [vmem:[#allocation5 + $0x430] sm:$0xff]
    %v199 = vld [vmem:[#allocation5 + $0x438] sm:$0xff]
    %v200 = vld [vmem:[#allocation5 + $0x440] sm:$0xff]
    %v201 = vld [vmem:[#allocation5 + $0x448] sm:$0xff]
    %v202 = vld [vmem:[#allocation5 + $0x450] sm:$0xff]
    %v203 = vld [vmem:[#allocation5 + $0x458] sm:$0xff]
    %v204 = vld [vmem:[#allocation5 + $0x460] sm:$0xff]
    %v205 = vld [vmem:[#allocation5 + $0x468] sm:$0xff]
    %v206 = vld [vmem:[#allocation5 + $0x470] sm:$0xff]
    %v207 = vld [vmem:[#allocation5 + $0x478] sm:$0xff]
    %v208 = vld [vmem:[#allocation5 + $0x480] sm:$0xff]
    %v209 = vld [vmem:[#allocation5 + $0x488] sm:$0xff]
    %v210 = vld [vmem:[#allocation5 + $0x490] sm:$0xff]
    %v211 = vld [vmem:[#allocation5 + $0x498] sm:$0xff]
    %v212 = vld [vmem:[#allocation5 + $0x4a0] sm:$0xff]
    %v213 = vld [vmem:[#allocation5 + $0x4a8] sm:$0xff]
    %v214 = vld [vmem:[#allocation5 + $0x4b0] sm:$0xff]
    %v215 = vld [vmem:[#allocation5 + $0x4b8] sm:$0xff]
    %v216 = vld [vmem:[#allocation5 + $0x4c0] sm:$0xff]
    %v217 = vld [vmem:[#allocation5 + $0x4c8] sm:$0xff]
    %v218 = vld [vmem:[#allocation5 + $0x4d0] sm:$0xff]
    %v219 = vld [vmem:[#allocation5 + $0x4d8] sm:$0xff]
    %v220 = vld [vmem:[#allocation5 + $0x4e0] sm:$0xff]
    %v221 = vld [vmem:[#allocation5 + $0x4e8] sm:$0xff]
    %v222 = vld [vmem:[#allocation5 + $0x4f0] sm:$0xff]
    %v223 = vld [vmem:[#allocation5 + $0x4f8] sm:$0xff]
    %v224 = vld [vmem:[#allocation5 + $0x500] sm:$0xff]
    %v225 = vld [vmem:[#allocation5 + $0x508] sm:$0xff]
    %v226 = vld [vmem:[#allocation5 + $0x510] sm:$0xff]
    %v227 = vld [vmem:[#allocation5 + $0x518] sm:$0xff]
    %v228 = vld [vmem:[#allocation5 + $0x520] sm:$0xff]
    %v229 = vld [vmem:[#allocation5 + $0x528] sm:$0xff]
    %v230 = vld [vmem:[#allocation5 + $0x530] sm:$0xff]
    %v231 = vld [vmem:[#allocation5 + $0x538] sm:$0xff]
    %v232 = vld [vmem:[#allocation5 + $0x540] sm:$0xff]
    %v233 = vld [vmem:[#allocation5 + $0x548] sm:$0xff]
    %v234 = vld [vmem:[#allocation5 + $0x550] sm:$0xff]
    %v235 = vld [vmem:[#allocation5 + $0x558] sm:$0xff]
    %v236 = vld [vmem:[#allocation5 + $0x560] sm:$0xff]
    %v237 = vld [vmem:[#allocation5 + $0x568] sm:$0xff]
    %v238 = vld [vmem:[#allocation5 + $0x570] sm:$0xff]
    %v239 = vld [vmem:[#allocation5 + $0x578] sm:$0xff]
    %v240 = vld [vmem:[#allocation5 + $0x580] sm:$0xff]
    %v241 = vld [vmem:[#allocation5 + $0x588] sm:$0xff]
    %v242 = vld [vmem:[#allocation5 + $0x590] sm:$0xff]
    %v243 = vld [vmem:[#allocation5 + $0x598] sm:$0xff]
    %v244 = vld [vmem:[#allocation5 + $0x5a0] sm:$0xff]
    %v245 = vld [vmem:[#allocation5 + $0x5a8] sm:$0xff]
    %v246 = vld [vmem:[#allocation5 + $0x5b0] sm:$0xff]
    %v247 = vld [vmem:[#allocation5 + $0x5b8] sm:$0xff]
    %v248 = vld [vmem:[#allocation5 + $0x5c0] sm:$0xff]
    %v249 = vld [vmem:[#allocation5 + $0x5c8] sm:$0xff]
    %v250 = vld [vmem:[#allocation5 + $0x5d0] sm:$0xff]
    %v251 = vld [vmem:[#allocation5 + $0x5d8] sm:$0xff]
    %v252 = vld [vmem:[#allocation5 + $0x5e0] sm:$0xff]
    %v253 = vld [vmem:[#allocation5 + $0x5e8] sm:$0xff]
    %v254 = vld [vmem:[#allocation5 + $0x5f0] sm:$0xff]
    %v255 = vld [vmem:[#allocation5 + $0x5f8] sm:$0xff]
    %v256 = vld [vmem:[#allocation5 + $0x600] sm:$0xff]
    %v257 = vld [vmem:[#allocation5 + $0x608] sm:$0xff]
    %v258 = vld [vmem:[#allocation5 + $0x610] sm:$0xff]
    %v259 = vld [vmem:[#allocation5 + $0x618] sm:$0xff]
    %v260 = vld [vmem:[#allocation5 + $0x620] sm:$0xff]
    %v261 = vld [vmem:[#allocation5 + $0x628] sm:$0xff]
    %v262 = vld [vmem:[#allocation5 + $0x630] sm:$0xff]
    %v263 = vld [vmem:[#allocation5 + $0x638] sm:$0xff]
    %v264 = vld [vmem:[#allocation5 + $0x640] sm:$0xff]
    %v265 = vld [vmem:[#allocation5 + $0x648] sm:$0xff]
    %v266 = vld [vmem:[#allocation5 + $0x650] sm:$0xff]
    %v267 = vld [vmem:[#allocation5 + $0x658] sm:$0xff]
    %v268 = vld [vmem:[#allocation5 + $0x660] sm:$0xff]
    %v269 = vld [vmem:[#allocation5 + $0x668] sm:$0xff]
    %v270 = vld [vmem:[#allocation5 + $0x670] sm:$0xff]
    %v271 = vld [vmem:[#allocation5 + $0x678] sm:$0xff]
    %v272 = vld [vmem:[#allocation5 + $0x680] sm:$0xff]
    %v273 = vld [vmem:[#allocation5 + $0x688] sm:$0xff]
    %v274 = vld [vmem:[#allocation5 + $0x690] sm:$0xff]
    %v275 = vld [vmem:[#allocation5 + $0x698] sm:$0xff]
    %v276 = vld [vmem:[#allocation5 + $0x6a0] sm:$0xff]
    %v277 = vld [vmem:[#allocation5 + $0x6a8] sm:$0xff]
    %v278 = vld [vmem:[#allocation5 + $0x6b0] sm:$0xff]
    %v279 = vld [vmem:[#allocation5 + $0x6b8] sm:$0xff]
    %v280 = vld [vmem:[#allocation5 + $0x6c0] sm:$0xff]
    %v281 = vld [vmem:[#allocation5 + $0x6c8] sm:$0xff]
    %v282 = vld [vmem:[#allocation5 + $0x6d0] sm:$0xff]
    %v283 = vld [vmem:[#allocation5 + $0x6d8] sm:$0xff]
    %v284 = vld [vmem:[#allocation5 + $0x6e0] sm:$0xff]
    %v285 = vld [vmem:[#allocation5 + $0x6e8] sm:$0xff]
    %v286 = vld [vmem:[#allocation5 + $0x6f0] sm:$0xff]
    %v287 = vld [vmem:[#allocation5 + $0x6f8] sm:$0xff]
    %v288 = vld [vmem:[#allocation5 + $0x700] sm:$0xff]
    %v289 = vld [vmem:[#allocation5 + $0x708] sm:$0xff]
    %v290 = vld [vmem:[#allocation5 + $0x710] sm:$0xff]
    %v291 = vld [vmem:[#allocation5 + $0x718] sm:$0xff]
    %v292 = vld [vmem:[#allocation5 + $0x720] sm:$0xff]
    %v293 = vld [vmem:[#allocation5 + $0x728] sm:$0xff]
    %v294 = vld [vmem:[#allocation5 + $0x730] sm:$0xff]
    %v295 = vld [vmem:[#allocation5 + $0x738] sm:$0xff]
    %v296 = vld [vmem:[#allocation5 + $0x740] sm:$0xff]
    %v297 = vld [vmem:[#allocation5 + $0x748] sm:$0xff]
    %v298 = vld [vmem:[#allocation5 + $0x750] sm:$0xff]
    %v299 = vld [vmem:[#allocation5 + $0x758] sm:$0xff]
    %v300 = vld [vmem:[#allocation5 + $0x760] sm:$0xff]
    %v301 = vld [vmem:[#allocation5 + $0x768] sm:$0xff]
    %v302 = vld [vmem:[#allocation5 + $0x770] sm:$0xff]
    %v303 = vld [vmem:[#allocation5 + $0x778] sm:$0xff]
    %v304 = vld [vmem:[#allocation5 + $0x780] sm:$0xff]
    %v305 = vld [vmem:[#allocation5 + $0x788] sm:$0xff]
    %v306 = vld [vmem:[#allocation5 + $0x790] sm:$0xff]
    %v307 = vld [vmem:[#allocation5 + $0x798] sm:$0xff]
    %v308 = vld [vmem:[#allocation5 + $0x7a0] sm:$0xff]
    %v309 = vld [vmem:[#allocation5 + $0x7a8] sm:$0xff]
    %v310 = vld [vmem:[#allocation5 + $0x7b0] sm:$0xff]
    %v311 = vld [vmem:[#allocation5 + $0x7b8] sm:$0xff]
    %v312 = vld [vmem:[#allocation5 + $0x7c0] sm:$0xff]
    %v313 = vld [vmem:[#allocation5 + $0x7c8] sm:$0xff]
    %v314 = vld [vmem:[#allocation5 + $0x7d0] sm:$0xff]
    %v315 = vld [vmem:[#allocation5 + $0x7d8] sm:$0xff]
    %v316 = vld [vmem:[#allocation5 + $0x7e0] sm:$0xff]
    %v317 = vld [vmem:[#allocation5 + $0x7e8] sm:$0xff]
    %v318 = vld [vmem:[#allocation5 + $0x7f0] sm:$0xff]
    %v319 = vld [vmem:[#allocation5 + $0x7f8] sm:$0xff]
    %v320 = vld [vmem:[#allocation5 + $0x800] sm:$0xff]
    %v321 = vld [vmem:[#allocation5 + $0x808] sm:$0xff]
    %v322 = vld [vmem:[#allocation5 + $0x810] sm:$0xff]
    %v323 = vld [vmem:[#allocation5 + $0x818] sm:$0xff]
    %v324 = vld [vmem:[#allocation5 + $0x820] sm:$0xff]
    %v325 = vld [vmem:[#allocation5 + $0x828] sm:$0xff]
    %v326 = vld [vmem:[#allocation5 + $0x830] sm:$0xff]
    %v327 = vld [vmem:[#allocation5 + $0x838] sm:$0xff]
    %v328 = vld [vmem:[#allocation5 + $0x840] sm:$0xff]
    %v329 = vld [vmem:[#allocation5 + $0x848] sm:$0xff]
    %v330 = vld [vmem:[#allocation5 + $0x850] sm:$0xff]
    %v331 = vld [vmem:[#allocation5 + $0x858] sm:$0xff]
    %v332 = vld [vmem:[#allocation5 + $0x860] sm:$0xff]
    %v333 = vld [vmem:[#allocation5 + $0x868] sm:$0xff]
    %v334 = vld [vmem:[#allocation5 + $0x870] sm:$0xff]
    %v335 = vld [vmem:[#allocation5 + $0x878] sm:$0xff]
    %v336 = vld [vmem:[#allocation5 + $0x880] sm:$0xff]
    %v337 = vld [vmem:[#allocation5 + $0x888] sm:$0xff]
    %v338 = vld [vmem:[#allocation5 + $0x890] sm:$0xff]
    %v339 = vld [vmem:[#allocation5 + $0x898] sm:$0xff]
    %v340 = vld [vmem:[#allocation5 + $0x8a0] sm:$0xff]
    %v341 = vld [vmem:[#allocation5 + $0x8a8] sm:$0xff]
    %v342 = vld [vmem:[#allocation5 + $0x8b0] sm:$0xff]
    %v343 = vld [vmem:[#allocation5 + $0x8b8] sm:$0xff]
    %v344 = vld [vmem:[#allocation5 + $0x8c0] sm:$0xff]
    %v345 = vld [vmem:[#allocation5 + $0x8c8] sm:$0xff]
    %v346 = vld [vmem:[#allocation5 + $0x8d0] sm:$0xff]
    %v347 = vld [vmem:[#allocation5 + $0x8d8] sm:$0xff]
    %v348 = vld [vmem:[#allocation5 + $0x8e0] sm:$0xff]
    %v349 = vld [vmem:[#allocation5 + $0x8e8] sm:$0xff]
    %v350 = vld [vmem:[#allocation5 + $0x8f0] sm:$0xff]
    %v351 = vld [vmem:[#allocation5 + $0x8f8] sm:$0xff]
    %v352 = vld [vmem:[#allocation5 + $0x900] sm:$0xff]
    %v353 = vld [vmem:[#allocation5 + $0x908] sm:$0xff]
    %v354 = vld [vmem:[#allocation5 + $0x910] sm:$0xff]
    %v355 = vld [vmem:[#allocation5 + $0x918] sm:$0xff]
    %v356 = vld [vmem:[#allocation5 + $0x920] sm:$0xff]
    %v357 = vld [vmem:[#allocation5 + $0x928] sm:$0xff]
    %v358 = vld [vmem:[#allocation5 + $0x930] sm:$0xff]
    %v359 = vld [vmem:[#allocation5 + $0x938] sm:$0xff]
    %v360 = vld [vmem:[#allocation5 + $0x940] sm:$0xff]
    %v361 = vld [vmem:[#allocation5 + $0x948] sm:$0xff]
    %v362 = vld [vmem:[#allocation5 + $0x950] sm:$0xff]
    %v363 = vld [vmem:[#allocation5 + $0x958] sm:$0xff]
    %v364 = vld [vmem:[#allocation5 + $0x960] sm:$0xff]
    %v365 = vld [vmem:[#allocation5 + $0x968] sm:$0xff]
    %v366 = vld [vmem:[#allocation5 + $0x970] sm:$0xff]
    %v367 = vld [vmem:[#allocation5 + $0x978] sm:$0xff]
    %v368 = vld [vmem:[#allocation5 + $0x980] sm:$0xff]
    %v369 = vld [vmem:[#allocation5 + $0x988] sm:$0xff]
    %v370 = vld [vmem:[#allocation5 + $0x990] sm:$0xff]
    %v371 = vld [vmem:[#allocation5 + $0x998] sm:$0xff]
    %v372 = vld [vmem:[#allocation5 + $0x9a0] sm:$0xff]
    %v373 = vld [vmem:[#allocation5 + $0x9a8] sm:$0xff]
    %v374 = vld [vmem:[#allocation5 + $0x9b0] sm:$0xff]
    %v375 = vld [vmem:[#allocation5 + $0x9b8] sm:$0xff]
    %v376 = vld [vmem:[#allocation5 + $0x9c0] sm:$0xff]
    %v377 = vld [vmem:[#allocation5 + $0x9c8] sm:$0xff]
    %v378 = vld [vmem:[#allocation5 + $0x9d0] sm:$0xff]
    %v379 = vld [vmem:[#allocation5 + $0x9d8] sm:$0xff]
    %v380 = vld [vmem:[#allocation5 + $0x9e0] sm:$0xff]
    %v381 = vld [vmem:[#allocation5 + $0x9e8] sm:$0xff]
    %v382 = vld [vmem:[#allocation5 + $0x9f0] sm:$0xff]
    %v383 = vld [vmem:[#allocation5 + $0x9f8] sm:$0xff]
    %v384 = vld [vmem:[#allocation5 + $0xa00] sm:$0xff]
    %v385 = vld [vmem:[#allocation5 + $0xa08] sm:$0xff]
    %v386 = vld [vmem:[#allocation5 + $0xa10] sm:$0xff]
    %v387 = vld [vmem:[#allocation5 + $0xa18] sm:$0xff]
    %v388 = vld [vmem:[#allocation5 + $0xa20] sm:$0xff]
    %v389 = vld [vmem:[#allocation5 + $0xa28] sm:$0xff]
    %v390 = vld [vmem:[#allocation5 + $0xa30] sm:$0xff]
    %v391 = vld [vmem:[#allocation5 + $0xa38] sm:$0xff]
    %v392 = vld [vmem:[#allocation5 + $0xa40] sm:$0xff]
    %v393 = vld [vmem:[#allocation5 + $0xa48] sm:$0xff]
    %v394 = vld [vmem:[#allocation5 + $0xa50] sm:$0xff]
    %v395 = vld [vmem:[#allocation5 + $0xa58] sm:$0xff]
    %v396 = vld [vmem:[#allocation5 + $0xa60] sm:$0xff]
    %v397 = vld [vmem:[#allocation5 + $0xa68] sm:$0xff]
    %v398 = vld [vmem:[#allocation5 + $0xa70] sm:$0xff]
    %v399 = vld [vmem:[#allocation5 + $0xa78] sm:$0xff]
    %v400 = vld [vmem:[#allocation5 + $0xa80] sm:$0xff]
    %v401 = vld [vmem:[#allocation5 + $0xa88] sm:$0xff]
    %v402 = vld [vmem:[#allocation5 + $0xa90] sm:$0xff]
    %v403 = vld [vmem:[#allocation5 + $0xa98] sm:$0xff]
    %v404 = vld [vmem:[#allocation5 + $0xaa0] sm:$0xff]
    %v405 = vld [vmem:[#allocation5 + $0xaa8] sm:$0xff]
    %v406 = vld [vmem:[#allocation5 + $0xab0] sm:$0xff]
    %v407 = vld [vmem:[#allocation5 + $0xab8] sm:$0xff]
    %v408 = vld [vmem:[#allocation5 + $0xac0] sm:$0xff]
    %v409 = vld [vmem:[#allocation5 + $0xac8] sm:$0xff]
    %v410 = vld [vmem:[#allocation5 + $0xad0] sm:$0xff]
    %v411 = vld [vmem:[#allocation5 + $0xad8] sm:$0xff]
    %v412 = vld [vmem:[#allocation5 + $0xae0] sm:$0xff]
    %v413 = vld [vmem:[#allocation5 + $0xae8] sm:$0xff]
    %v414 = vld [vmem:[#allocation5 + $0xaf0] sm:$0xff]
    %v415 = vld [vmem:[#allocation5 + $0xaf8] sm:$0xff]
    %v416 = vld [vmem:[#allocation5 + $0xb00] sm:$0xff]
    %v417 = vld [vmem:[#allocation5 + $0xb08] sm:$0xff]
    %v418 = vld [vmem:[#allocation5 + $0xb10] sm:$0xff]
    %v419 = vld [vmem:[#allocation5 + $0xb18] sm:$0xff]
    %v420 = vld [vmem:[#allocation5 + $0xb20] sm:$0xff]
    %v421 = vld [vmem:[#allocation5 + $0xb28] sm:$0xff]
    %v422 = vld [vmem:[#allocation5 + $0xb30] sm:$0xff]
    %v423 = vld [vmem:[#allocation5 + $0xb38] sm:$0xff]
    %v424 = vld [vmem:[#allocation5 + $0xb40] sm:$0xff]
    %v425 = vld [vmem:[#allocation5 + $0xb48] sm:$0xff]
    %v426 = vld [vmem:[#allocation5 + $0xb50] sm:$0xff]
    %v427 = vld [vmem:[#allocation5 + $0xb58] sm:$0xff]
    %v428 = vld [vmem:[#allocation5 + $0xb60] sm:$0xff]
    %v429 = vld [vmem:[#allocation5 + $0xb68] sm:$0xff]
    %v430 = vld [vmem:[#allocation5 + $0xb70] sm:$0xff]
    %v431 = vld [vmem:[#allocation5 + $0xb78] sm:$0xff]
    %v432 = vld [vmem:[#allocation5 + $0xb80] sm:$0xff]
    %v433 = vld [vmem:[#allocation5 + $0xb88] sm:$0xff]
    %v434 = vld [vmem:[#allocation5 + $0xb90] sm:$0xff]
    %v435 = vld [vmem:[#allocation5 + $0xb98] sm:$0xff]
    %v436 = vld [vmem:[#allocation5 + $0xba0] sm:$0xff]
    %v437 = vld [vmem:[#allocation5 + $0xba8] sm:$0xff]
    %v438 = vld [vmem:[#allocation5 + $0xbb0] sm:$0xff]
    %v439 = vld [vmem:[#allocation5 + $0xbb8] sm:$0xff]
    %v440 = vld [vmem:[#allocation5 + $0xbc0] sm:$0xff]
    %v441 = vld [vmem:[#allocation5 + $0xbc8] sm:$0xff]
    %v442 = vld [vmem:[#allocation5 + $0xbd0] sm:$0xff]
    %v443 = vld [vmem:[#allocation5 + $0xbd8] sm:$0xff]
    %v444 = vld [vmem:[#allocation5 + $0xbe0] sm:$0xff]
    %v445 = vld [vmem:[#allocation5 + $0xbe8] sm:$0xff]
    %v446 = vld [vmem:[#allocation5 + $0xbf0] sm:$0xff]
    %v447 = vld [vmem:[#allocation5 + $0xbf8] sm:$0xff]
    %v448 = vld [vmem:[#allocation7] sm:$0x1]
    %v450 = vperm.slane %v448, 0
    %458 = vst [vmem:[#allocation1] ss:$4 sm:$0xff] %v58
    %s459 = scalar_lea.vmem [#allocation1], 32
    %460 = vst [vmem:[%s459] ss:$4 sm:$0xff] %v59
    %v461 = vld.sshfl [vmem:[#allocation1] sm:$0xff pattern:$0x73625140]
    %v462 = vld.sshfl [vmem:[#allocation1 + $0x8] sm:$0xff pattern:$0x73625140]
    %v463 = vld.sshfl [vmem:[#allocation1 + $0x10] sm:$0xff pattern:$0x73625140]
    %v464 = vld.sshfl [vmem:[#allocation1 + $0x18] sm:$0xff pattern:$0x73625140]
    %v465 = vld.sshfl [vmem:[#allocation1 + $0x20] sm:$0xff pattern:$0x73625140]
    %v466 = vld.sshfl [vmem:[#allocation1 + $0x28] sm:$0xff pattern:$0x73625140]
    %v467 = vld.sshfl [vmem:[#allocation1 + $0x30] sm:$0xff pattern:$0x73625140]
    %v468 = vld.sshfl [vmem:[#allocation1 + $0x38] sm:$0xff pattern:$0x73625140]
    %469 = vst [vmem:[#allocation1] ss:$4 sm:$0xff] %v60
    %470 = vst [vmem:[%s459] ss:$4 sm:$0xff] %v61
    %v471 = vld.sshfl [vmem:[#allocation1] sm:$0xff pattern:$0x73625140]
    %v472 = vld.sshfl [vmem:[#allocation1 + $0x8] sm:$0xff pattern:$0x73625140]
    %v473 = vld.sshfl [vmem:[#allocation1 + $0x10] sm:$0xff pattern:$0x73625140]
    %v474 = vld.sshfl [vmem:[#allocation1 + $0x18] sm:$0xff pattern:$0x73625140]
    %v475 = vld.sshfl [vmem:[#allocation1 + $0x20] sm:$0xff pattern:$0x73625140]
    %v476 = vld.sshfl [vmem:[#allocation1 + $0x28] sm:$0xff pattern:$0x73625140]
    %v477 = vld.sshfl [vmem:[#allocation1 + $0x30] sm:$0xff pattern:$0x73625140]
    %v478 = vld.sshfl [vmem:[#allocation1 + $0x38] sm:$0xff pattern:$0x73625140]
    %479 = vst [vmem:[#allocation1] ss:$4 sm:$0xff] %v62
    %480 = vst [vmem:[%s459] ss:$4 sm:$0xff] %v63
    %v481 = vld.sshfl [vmem:[#allocation1] sm:$0xff pattern:$0x73625140]
    %v482 = vld.sshfl [vmem:[#allocation1 + $0x8] sm:$0xff pattern:$0x73625140]
    %v483 = vld.sshfl [vmem:[#allocation1 + $0x10] sm:$0xff pattern:$0x73625140]
    %v484 = vld.sshfl [vmem:[#allocation1 + $0x18] sm:$0xff pattern:$0x73625140]
    %v485 = vld.sshfl [vmem:[#allocation1 + $0x20] sm:$0xff pattern:$0x73625140]
    %v486 = vld.sshfl [vmem:[#allocation1 + $0x28] sm:$0xff pattern:$0x73625140]
    %v487 = vld.sshfl [vmem:[#allocation1 + $0x30] sm:$0xff pattern:$0x73625140]
    %v488 = vld.sshfl [vmem:[#allocation1 + $0x38] sm:$0xff pattern:$0x73625140]
    %513 = vmatpush.xpose.msra.mxu0 %v424
    %514 = vmatpush.xpose.msra.mxu0 %v400
    %515 = vmatpush.xpose.msra.mxu0 %v376
    %516 = vmatpush.xpose.msra.mxu0 %v352
    %517 = vmatpush.xpose.msra.mxu0 %v328
    %518 = vmatpush.xpose.msra.mxu0 %v304
    %519 = vmatpush.xpose.msra.mxu0 %v280
    %520 = vmatpush.xpose.msra.mxu0 %v256
    %521 = vmatpush.xpose.msra.mxu0 %v232
    %522 = vmatpush.xpose.msra.mxu0 %v208
    %523 = vmatpush.xpose.msra.mxu0 %v184
    %524 = vmatpush.xpose.msra.mxu0 %v160
    %525 = vmatpush.xpose.msra.mxu0 %v136
    %526 = vmatpush.xpose.msra.mxu0 %v112
    %527 = vmatpush.xpose.msra.mxu0 %v88
    %528 = vmatpush.xpose.msra.mxu0 %v64
    %529 = vmatmul.f32.gmra.mxu0 %v461
    %v530 = vpop.f32.mrf.mxu0
    %v531 = vadd.f32 %v450, %v530
    %532 = vdwg.mxu0
    %533 = vmatpush.xpose.msra.mxu0 %v425
    %534 = vmatpush.xpose.msra.mxu0 %v401
    %535 = vmatpush.xpose.msra.mxu0 %v377
    %536 = vmatpush.xpose.msra.mxu0 %v353
    %537 = vmatpush.xpose.msra.mxu0 %v329
    %538 = vmatpush.xpose.msra.mxu0 %v305
    %539 = vmatpush.xpose.msra.mxu0 %v281
    %540 = vmatpush.xpose.msra.mxu0 %v257
    %541 = vmatpush.xpose.msra.mxu0 %v233
    %542 = vmatpush.xpose.msra.mxu0 %v209
    %543 = vmatpush.xpose.msra.mxu0 %v185
    %544 = vmatpush.xpose.msra.mxu0 %v161
    %545 = vmatpush.xpose.msra.mxu0 %v137
    %546 = vmatpush.xpose.msra.mxu0 %v113
    %547 = vmatpush.xpose.msra.mxu0 %v89
    %548 = vmatpush.xpose.msra.mxu0 %v65
    %549 = vmatmul.f32.gmra.mxu0 %v462
    %v550 = vpop.f32.mrf.mxu0
    %v551 = vadd.f32 %v531, %v550
    %552 = vdwg.mxu0
    %553 = vmatpush.xpose.msra.mxu0 %v426
    %554 = vmatpush.xpose.msra.mxu0 %v402
    %555 = vmatpush.xpose.msra.mxu0 %v378
    %556 = vmatpush.xpose.msra.mxu0 %v354
    %557 = vmatpush.xpose.msra.mxu0 %v330
    %558 = vmatpush.xpose.msra.mxu0 %v306
    %559 = vmatpush.xpose.msra.mxu0 %v282
    %560 = vmatpush.xpose.msra.mxu0 %v258
    %561 = vmatpush.xpose.msra.mxu0 %v234
    %562 = vmatpush.xpose.msra.mxu0 %v210
    %563 = vmatpush.xpose.msra.mxu0 %v186
    %564 = vmatpush.xpose.msra.mxu0 %v162
    %565 = vmatpush.xpose.msra.mxu0 %v138
    %566 = vmatpush.xpose.msra.mxu0 %v114
    %567 = vmatpush.xpose.msra.mxu0 %v90
    %568 = vmatpush.xpose.msra.mxu0 %v66
    %569 = vmatmul.f32.gmra.mxu0 %v463
    %v570 = vpop.f32.mrf.mxu0
    %v571 = vadd.f32 %v551, %v570
    %572 = vdwg.mxu0
    %573 = vmatpush.xpose.msra.mxu0 %v427
    %574 = vmatpush.xpose.msra.mxu0 %v403
    %575 = vmatpush.xpose.msra.mxu0 %v379
    %576 = vmatpush.xpose.msra.mxu0 %v355
    %577 = vmatpush.xpose.msra.mxu0 %v331
    %578 = vmatpush.xpose.msra.mxu0 %v307
    %579 = vmatpush.xpose.msra.mxu0 %v283
    %580 = vmatpush.xpose.msra.mxu0 %v259
    %581 = vmatpush.xpose.msra.mxu0 %v235
    %582 = vmatpush.xpose.msra.mxu0 %v211
    %583 = vmatpush.xpose.msra.mxu0 %v187
    %584 = vmatpush.xpose.msra.mxu0 %v163
    %585 = vmatpush.xpose.msra.mxu0 %v139
    %586 = vmatpush.xpose.msra.mxu0 %v115
    %587 = vmatpush.xpose.msra.mxu0 %v91
    %588 = vmatpush.xpose.msra.mxu0 %v67
    %589 = vmatmul.f32.gmra.mxu0 %v464
    %v590 = vpop.f32.mrf.mxu0
    %v591 = vadd.f32 %v571, %v590
    %592 = vdwg.mxu0
    %593 = vmatpush.xpose.msra.mxu0 %v428
    %594 = vmatpush.xpose.msra.mxu0 %v404
    %595 = vmatpush.xpose.msra.mxu0 %v380
    %596 = vmatpush.xpose.msra.mxu0 %v356
    %597 = vmatpush.xpose.msra.mxu0 %v332
    %598 = vmatpush.xpose.msra.mxu0 %v308
    %599 = vmatpush.xpose.msra.mxu0 %v284
    %600 = vmatpush.xpose.msra.mxu0 %v260
    %601 = vmatpush.xpose.msra.mxu0 %v236
    %602 = vmatpush.xpose.msra.mxu0 %v212
    %603 = vmatpush.xpose.msra.mxu0 %v188
    %604 = vmatpush.xpose.msra.mxu0 %v164
    %605 = vmatpush.xpose.msra.mxu0 %v140
    %606 = vmatpush.xpose.msra.mxu0 %v116
    %607 = vmatpush.xpose.msra.mxu0 %v92
    %608 = vmatpush.xpose.msra.mxu0 %v68
    %609 = vmatmul.f32.gmra.mxu0 %v465
    %v610 = vpop.f32.mrf.mxu0
    %v611 = vadd.f32 %v591, %v610
    %612 = vdwg.mxu0
    %613 = vmatpush.xpose.msra.mxu0 %v429
    %614 = vmatpush.xpose.msra.mxu0 %v405
    %615 = vmatpush.xpose.msra.mxu0 %v381
    %616 = vmatpush.xpose.msra.mxu0 %v357
    %617 = vmatpush.xpose.msra.mxu0 %v333
    %618 = vmatpush.xpose.msra.mxu0 %v309
    %619 = vmatpush.xpose.msra.mxu0 %v285
    %620 = vmatpush.xpose.msra.mxu0 %v261
    %621 = vmatpush.xpose.msra.mxu0 %v237
    %622 = vmatpush.xpose.msra.mxu0 %v213
    %623 = vmatpush.xpose.msra.mxu0 %v189
    %624 = vmatpush.xpose.msra.mxu0 %v165
    %625 = vmatpush.xpose.msra.mxu0 %v141
    %626 = vmatpush.xpose.msra.mxu0 %v117
    %627 = vmatpush.xpose.msra.mxu0 %v93
    %628 = vmatpush.xpose.msra.mxu0 %v69
    %629 = vmatmul.f32.gmra.mxu0 %v466
    %v630 = vpop.f32.mrf.mxu0
    %v631 = vadd.f32 %v611, %v630
    %632 = vdwg.mxu0
    %633 = vmatpush.xpose.msra.mxu0 %v430
    %634 = vmatpush.xpose.msra.mxu0 %v406
    %635 = vmatpush.xpose.msra.mxu0 %v382
    %636 = vmatpush.xpose.msra.mxu0 %v358
    %637 = vmatpush.xpose.msra.mxu0 %v334
    %638 = vmatpush.xpose.msra.mxu0 %v310
    %639 = vmatpush.xpose.msra.mxu0 %v286
    %640 = vmatpush.xpose.msra.mxu0 %v262
    %641 = vmatpush.xpose.msra.mxu0 %v238
    %642 = vmatpush.xpose.msra.mxu0 %v214
    %643 = vmatpush.xpose.msra.mxu0 %v190
    %644 = vmatpush.xpose.msra.mxu0 %v166
    %645 = vmatpush.xpose.msra.mxu0 %v142
    %646 = vmatpush.xpose.msra.mxu0 %v118
    %647 = vmatpush.xpose.msra.mxu0 %v94
    %648 = vmatpush.xpose.msra.mxu0 %v70
    %649 = vmatmul.f32.gmra.mxu0 %v467
    %v650 = vpop.f32.mrf.mxu0
    %v651 = vadd.f32 %v631, %v650
    %652 = vdwg.mxu0
    %653 = vmatpush.xpose.msra.mxu0 %v431
    %654 = vmatpush.xpose.msra.mxu0 %v407
    %655 = vmatpush.xpose.msra.mxu0 %v383
    %656 = vmatpush.xpose.msra.mxu0 %v359
    %657 = vmatpush.xpose.msra.mxu0 %v335
    %658 = vmatpush.xpose.msra.mxu0 %v311
    %659 = vmatpush.xpose.msra.mxu0 %v287
    %660 = vmatpush.xpose.msra.mxu0 %v263
    %661 = vmatpush.xpose.msra.mxu0 %v239
    %662 = vmatpush.xpose.msra.mxu0 %v215
    %663 = vmatpush.xpose.msra.mxu0 %v191
    %664 = vmatpush.xpose.msra.mxu0 %v167
    %665 = vmatpush.xpose.msra.mxu0 %v143
    %666 = vmatpush.xpose.msra.mxu0 %v119
    %667 = vmatpush.xpose.msra.mxu0 %v95
    %668 = vmatpush.xpose.msra.mxu0 %v71
    %669 = vmatmul.f32.gmra.mxu0 %v468
    %v670 = vpop.f32.mrf.mxu0
    %v671 = vadd.f32 %v651, %v670
    %672 = vdwg.mxu0
    %673 = vmatpush.xpose.msra.mxu0 %v432
    %674 = vmatpush.xpose.msra.mxu0 %v408
    %675 = vmatpush.xpose.msra.mxu0 %v384
    %676 = vmatpush.xpose.msra.mxu0 %v360
    %677 = vmatpush.xpose.msra.mxu0 %v336
    %678 = vmatpush.xpose.msra.mxu0 %v312
    %679 = vmatpush.xpose.msra.mxu0 %v288
    %680 = vmatpush.xpose.msra.mxu0 %v264
    %681 = vmatpush.xpose.msra.mxu0 %v240
    %682 = vmatpush.xpose.msra.mxu0 %v216
    %683 = vmatpush.xpose.msra.mxu0 %v192
    %684 = vmatpush.xpose.msra.mxu0 %v168
    %685 = vmatpush.xpose.msra.mxu0 %v144
    %686 = vmatpush.xpose.msra.mxu0 %v120
    %687 = vmatpush.xpose.msra.mxu0 %v96
    %688 = vmatpush.xpose.msra.mxu0 %v72
    %689 = vmatmul.f32.gmra.mxu0 %v471
    %v690 = vpop.f32.mrf.mxu0
    %v691 = vadd.f32 %v671, %v690
    %692 = vdwg.mxu0
    %693 = vmatpush.xpose.msra.mxu0 %v433
    %694 = vmatpush.xpose.msra.mxu0 %v409
    %695 = vmatpush.xpose.msra.mxu0 %v385
    %696 = vmatpush.xpose.msra.mxu0 %v361
    %697 = vmatpush.xpose.msra.mxu0 %v337
    %698 = vmatpush.xpose.msra.mxu0 %v313
    %699 = vmatpush.xpose.msra.mxu0 %v289
    %700 = vmatpush.xpose.msra.mxu0 %v265
    %701 = vmatpush.xpose.msra.mxu0 %v241
    %702 = vmatpush.xpose.msra.mxu0 %v217
    %703 = vmatpush.xpose.msra.mxu0 %v193
    %704 = vmatpush.xpose.msra.mxu0 %v169
    %705 = vmatpush.xpose.msra.mxu0 %v145
    %706 = vmatpush.xpose.msra.mxu0 %v121
    %707 = vmatpush.xpose.msra.mxu0 %v97
    %708 = vmatpush.xpose.msra.mxu0 %v73
    %709 = vmatmul.f32.gmra.mxu0 %v472
    %v710 = vpop.f32.mrf.mxu0
    %v711 = vadd.f32 %v691, %v710
    %712 = vdwg.mxu0
    %713 = vmatpush.xpose.msra.mxu0 %v434
    %714 = vmatpush.xpose.msra.mxu0 %v410
    %715 = vmatpush.xpose.msra.mxu0 %v386
    %716 = vmatpush.xpose.msra.mxu0 %v362
    %717 = vmatpush.xpose.msra.mxu0 %v338
    %718 = vmatpush.xpose.msra.mxu0 %v314
    %719 = vmatpush.xpose.msra.mxu0 %v290
    %720 = vmatpush.xpose.msra.mxu0 %v266
    %721 = vmatpush.xpose.msra.mxu0 %v242
    %722 = vmatpush.xpose.msra.mxu0 %v218
    %723 = vmatpush.xpose.msra.mxu0 %v194
    %724 = vmatpush.xpose.msra.mxu0 %v170
    %725 = vmatpush.xpose.msra.mxu0 %v146
    %726 = vmatpush.xpose.msra.mxu0 %v122
    %727 = vmatpush.xpose.msra.mxu0 %v98
    %728 = vmatpush.xpose.msra.mxu0 %v74
    %729 = vmatmul.f32.gmra.mxu0 %v473
    %v730 = vpop.f32.mrf.mxu0
    %v731 = vadd.f32 %v711, %v730
    %732 = vdwg.mxu0
    %733 = vmatpush.xpose.msra.mxu0 %v435
    %734 = vmatpush.xpose.msra.mxu0 %v411
    %735 = vmatpush.xpose.msra.mxu0 %v387
    %736 = vmatpush.xpose.msra.mxu0 %v363
    %737 = vmatpush.xpose.msra.mxu0 %v339
    %738 = vmatpush.xpose.msra.mxu0 %v315
    %739 = vmatpush.xpose.msra.mxu0 %v291
    %740 = vmatpush.xpose.msra.mxu0 %v267
    %741 = vmatpush.xpose.msra.mxu0 %v243
    %742 = vmatpush.xpose.msra.mxu0 %v219
    %743 = vmatpush.xpose.msra.mxu0 %v195
    %744 = vmatpush.xpose.msra.mxu0 %v171
    %745 = vmatpush.xpose.msra.mxu0 %v147
    %746 = vmatpush.xpose.msra.mxu0 %v123
    %747 = vmatpush.xpose.msra.mxu0 %v99
    %748 = vmatpush.xpose.msra.mxu0 %v75
    %749 = vmatmul.f32.gmra.mxu0 %v474
    %v750 = vpop.f32.mrf.mxu0
    %v751 = vadd.f32 %v731, %v750
    %752 = vdwg.mxu0
    %753 = vmatpush.xpose.msra.mxu0 %v436
    %754 = vmatpush.xpose.msra.mxu0 %v412
    %755 = vmatpush.xpose.msra.mxu0 %v388
    %756 = vmatpush.xpose.msra.mxu0 %v364
    %757 = vmatpush.xpose.msra.mxu0 %v340
    %758 = vmatpush.xpose.msra.mxu0 %v316
    %759 = vmatpush.xpose.msra.mxu0 %v292
    %760 = vmatpush.xpose.msra.mxu0 %v268
    %761 = vmatpush.xpose.msra.mxu0 %v244
    %762 = vmatpush.xpose.msra.mxu0 %v220
    %763 = vmatpush.xpose.msra.mxu0 %v196
    %764 = vmatpush.xpose.msra.mxu0 %v172
    %765 = vmatpush.xpose.msra.mxu0 %v148
    %766 = vmatpush.xpose.msra.mxu0 %v124
    %767 = vmatpush.xpose.msra.mxu0 %v100
    %768 = vmatpush.xpose.msra.mxu0 %v76
    %769 = vmatmul.f32.gmra.mxu0 %v475
    %v770 = vpop.f32.mrf.mxu0
    %v771 = vadd.f32 %v751, %v770
    %772 = vdwg.mxu0
    %773 = vmatpush.xpose.msra.mxu0 %v437
    %774 = vmatpush.xpose.msra.mxu0 %v413
    %775 = vmatpush.xpose.msra.mxu0 %v389
    %776 = vmatpush.xpose.msra.mxu0 %v365
    %777 = vmatpush.xpose.msra.mxu0 %v341
    %778 = vmatpush.xpose.msra.mxu0 %v317
    %779 = vmatpush.xpose.msra.mxu0 %v293
    %780 = vmatpush.xpose.msra.mxu0 %v269
    %781 = vmatpush.xpose.msra.mxu0 %v245
    %782 = vmatpush.xpose.msra.mxu0 %v221
    %783 = vmatpush.xpose.msra.mxu0 %v197
    %784 = vmatpush.xpose.msra.mxu0 %v173
    %785 = vmatpush.xpose.msra.mxu0 %v149
    %786 = vmatpush.xpose.msra.mxu0 %v125
    %787 = vmatpush.xpose.msra.mxu0 %v101
    %788 = vmatpush.xpose.msra.mxu0 %v77
    %789 = vmatmul.f32.gmra.mxu0 %v476
    %v790 = vpop.f32.mrf.mxu0
    %v791 = vadd.f32 %v771, %v790
    %792 = vdwg.mxu0
    %793 = vmatpush.xpose.msra.mxu0 %v438
    %794 = vmatpush.xpose.msra.mxu0 %v414
    %795 = vmatpush.xpose.msra.mxu0 %v390
    %796 = vmatpush.xpose.msra.mxu0 %v366
    %797 = vmatpush.xpose.msra.mxu0 %v342
    %798 = vmatpush.xpose.msra.mxu0 %v318
    %799 = vmatpush.xpose.msra.mxu0 %v294
    %800 = vmatpush.xpose.msra.mxu0 %v270
    %801 = vmatpush.xpose.msra.mxu0 %v246
    %802 = vmatpush.xpose.msra.mxu0 %v222
    %803 = vmatpush.xpose.msra.mxu0 %v198
    %804 = vmatpush.xpose.msra.mxu0 %v174
    %805 = vmatpush.xpose.msra.mxu0 %v150
    %806 = vmatpush.xpose.msra.mxu0 %v126
    %807 = vmatpush.xpose.msra.mxu0 %v102
    %808 = vmatpush.xpose.msra.mxu0 %v78
    %809 = vmatmul.f32.gmra.mxu0 %v477
    %v810 = vpop.f32.mrf.mxu0
    %v811 = vadd.f32 %v791, %v810
    %812 = vdwg.mxu0
    %813 = vmatpush.xpose.msra.mxu0 %v439
    %814 = vmatpush.xpose.msra.mxu0 %v415
    %815 = vmatpush.xpose.msra.mxu0 %v391
    %816 = vmatpush.xpose.msra.mxu0 %v367
    %817 = vmatpush.xpose.msra.mxu0 %v343
    %818 = vmatpush.xpose.msra.mxu0 %v319
    %819 = vmatpush.xpose.msra.mxu0 %v295
    %820 = vmatpush.xpose.msra.mxu0 %v271
    %821 = vmatpush.xpose.msra.mxu0 %v247
    %822 = vmatpush.xpose.msra.mxu0 %v223
    %823 = vmatpush.xpose.msra.mxu0 %v199
    %824 = vmatpush.xpose.msra.mxu0 %v175
    %825 = vmatpush.xpose.msra.mxu0 %v151
    %826 = vmatpush.xpose.msra.mxu0 %v127
    %827 = vmatpush.xpose.msra.mxu0 %v103
    %828 = vmatpush.xpose.msra.mxu0 %v79
    %829 = vmatmul.f32.gmra.mxu0 %v478
    %v830 = vpop.f32.mrf.mxu0
    %v831 = vadd.f32 %v811, %v830
    %832 = vdwg.mxu0
    %833 = vmatpush.xpose.msra.mxu0 %v440
    %834 = vmatpush.xpose.msra.mxu0 %v416
    %835 = vmatpush.xpose.msra.mxu0 %v392
    %836 = vmatpush.xpose.msra.mxu0 %v368
    %837 = vmatpush.xpose.msra.mxu0 %v344
    %838 = vmatpush.xpose.msra.mxu0 %v320
    %839 = vmatpush.xpose.msra.mxu0 %v296
    %840 = vmatpush.xpose.msra.mxu0 %v272
    %841 = vmatpush.xpose.msra.mxu0 %v248
    %842 = vmatpush.xpose.msra.mxu0 %v224
    %843 = vmatpush.xpose.msra.mxu0 %v200
    %844 = vmatpush.xpose.msra.mxu0 %v176
    %845 = vmatpush.xpose.msra.mxu0 %v152
    %846 = vmatpush.xpose.msra.mxu0 %v128
    %847 = vmatpush.xpose.msra.mxu0 %v104
    %848 = vmatpush.xpose.msra.mxu0 %v80
    %849 = vmatmul.f32.gmra.mxu0 %v481
    %v850 = vpop.f32.mrf.mxu0
    %v851 = vadd.f32 %v831, %v850
    %852 = vdwg.mxu0
    %853 = vmatpush.xpose.msra.mxu0 %v441
    %854 = vmatpush.xpose.msra.mxu0 %v417
    %855 = vmatpush.xpose.msra.mxu0 %v393
    %856 = vmatpush.xpose.msra.mxu0 %v369
    %857 = vmatpush.xpose.msra.mxu0 %v345
    %858 = vmatpush.xpose.msra.mxu0 %v321
    %859 = vmatpush.xpose.msra.mxu0 %v297
    %860 = vmatpush.xpose.msra.mxu0 %v273
    %861 = vmatpush.xpose.msra.mxu0 %v249
    %862 = vmatpush.xpose.msra.mxu0 %v225
    %863 = vmatpush.xpose.msra.mxu0 %v201
    %864 = vmatpush.xpose.msra.mxu0 %v177
    %865 = vmatpush.xpose.msra.mxu0 %v153
    %866 = vmatpush.xpose.msra.mxu0 %v129
    %867 = vmatpush.xpose.msra.mxu0 %v105
    %868 = vmatpush.xpose.msra.mxu0 %v81
    %869 = vmatmul.f32.gmra.mxu0 %v482
    %v870 = vpop.f32.mrf.mxu0
    %v871 = vadd.f32 %v851, %v870
    %872 = vdwg.mxu0
    %873 = vmatpush.xpose.msra.mxu0 %v442
    %874 = vmatpush.xpose.msra.mxu0 %v418
    %875 = vmatpush.xpose.msra.mxu0 %v394
    %876 = vmatpush.xpose.msra.mxu0 %v370
    %877 = vmatpush.xpose.msra.mxu0 %v346
    %878 = vmatpush.xpose.msra.mxu0 %v322
    %879 = vmatpush.xpose.msra.mxu0 %v298
    %880 = vmatpush.xpose.msra.mxu0 %v274
    %881 = vmatpush.xpose.msra.mxu0 %v250
    %882 = vmatpush.xpose.msra.mxu0 %v226
    %883 = vmatpush.xpose.msra.mxu0 %v202
    %884 = vmatpush.xpose.msra.mxu0 %v178
    %885 = vmatpush.xpose.msra.mxu0 %v154
    %886 = vmatpush.xpose.msra.mxu0 %v130
    %887 = vmatpush.xpose.msra.mxu0 %v106
    %888 = vmatpush.xpose.msra.mxu0 %v82
    %889 = vmatmul.f32.gmra.mxu0 %v483
    %v890 = vpop.f32.mrf.mxu0
    %v891 = vadd.f32 %v871, %v890
    %892 = vdwg.mxu0
    %893 = vmatpush.xpose.msra.mxu0 %v443
    %894 = vmatpush.xpose.msra.mxu0 %v419
    %895 = vmatpush.xpose.msra.mxu0 %v395
    %896 = vmatpush.xpose.msra.mxu0 %v371
    %897 = vmatpush.xpose.msra.mxu0 %v347
    %898 = vmatpush.xpose.msra.mxu0 %v323
    %899 = vmatpush.xpose.msra.mxu0 %v299
    %900 = vmatpush.xpose.msra.mxu0 %v275
    %901 = vmatpush.xpose.msra.mxu0 %v251
    %902 = vmatpush.xpose.msra.mxu0 %v227
    %903 = vmatpush.xpose.msra.mxu0 %v203
    %904 = vmatpush.xpose.msra.mxu0 %v179
    %905 = vmatpush.xpose.msra.mxu0 %v155
    %906 = vmatpush.xpose.msra.mxu0 %v131
    %907 = vmatpush.xpose.msra.mxu0 %v107
    %908 = vmatpush.xpose.msra.mxu0 %v83
    %909 = vmatmul.f32.gmra.mxu0 %v484
    %v910 = vpop.f32.mrf.mxu0
    %v911 = vadd.f32 %v891, %v910
    %912 = vdwg.mxu0
    %913 = vmatpush.xpose.msra.mxu0 %v444
    %914 = vmatpush.xpose.msra.mxu0 %v420
    %915 = vmatpush.xpose.msra.mxu0 %v396
    %916 = vmatpush.xpose.msra.mxu0 %v372
    %917 = vmatpush.xpose.msra.mxu0 %v348
    %918 = vmatpush.xpose.msra.mxu0 %v324
    %919 = vmatpush.xpose.msra.mxu0 %v300
    %920 = vmatpush.xpose.msra.mxu0 %v276
    %921 = vmatpush.xpose.msra.mxu0 %v252
    %922 = vmatpush.xpose.msra.mxu0 %v228
    %923 = vmatpush.xpose.msra.mxu0 %v204
    %924 = vmatpush.xpose.msra.mxu0 %v180
    %925 = vmatpush.xpose.msra.mxu0 %v156
    %926 = vmatpush.xpose.msra.mxu0 %v132
    %927 = vmatpush.xpose.msra.mxu0 %v108
    %928 = vmatpush.xpose.msra.mxu0 %v84
    %929 = vmatmul.f32.gmra.mxu0 %v485
    %v930 = vpop.f32.mrf.mxu0
    %v931 = vadd.f32 %v911, %v930
    %932 = vdwg.mxu0
    %933 = vmatpush.xpose.msra.mxu0 %v445
    %934 = vmatpush.xpose.msra.mxu0 %v421
    %935 = vmatpush.xpose.msra.mxu0 %v397
    %936 = vmatpush.xpose.msra.mxu0 %v373
    %937 = vmatpush.xpose.msra.mxu0 %v349
    %938 = vmatpush.xpose.msra.mxu0 %v325
    %939 = vmatpush.xpose.msra.mxu0 %v301
    %940 = vmatpush.xpose.msra.mxu0 %v277
    %941 = vmatpush.xpose.msra.mxu0 %v253
    %942 = vmatpush.xpose.msra.mxu0 %v229
    %943 = vmatpush.xpose.msra.mxu0 %v205
    %944 = vmatpush.xpose.msra.mxu0 %v181
    %945 = vmatpush.xpose.msra.mxu0 %v157
    %946 = vmatpush.xpose.msra.mxu0 %v133
    %947 = vmatpush.xpose.msra.mxu0 %v109
    %948 = vmatpush.xpose.msra.mxu0 %v85
    %949 = vmatmul.f32.gmra.mxu0 %v486
    %v950 = vpop.f32.mrf.mxu0
    %v951 = vadd.f32 %v931, %v950
    %952 = vdwg.mxu0
    %953 = vmatpush.xpose.msra.mxu0 %v446
    %954 = vmatpush.xpose.msra.mxu0 %v422
    %955 = vmatpush.xpose.msra.mxu0 %v398
    %956 = vmatpush.xpose.msra.mxu0 %v374
    %957 = vmatpush.xpose.msra.mxu0 %v350
    %958 = vmatpush.xpose.msra.mxu0 %v326
    %959 = vmatpush.xpose.msra.mxu0 %v302
    %960 = vmatpush.xpose.msra.mxu0 %v278
    %961 = vmatpush.xpose.msra.mxu0 %v254
    %962 = vmatpush.xpose.msra.mxu0 %v230
    %963 = vmatpush.xpose.msra.mxu0 %v206
    %964 = vmatpush.xpose.msra.mxu0 %v182
    %965 = vmatpush.xpose.msra.mxu0 %v158
    %966 = vmatpush.xpose.msra.mxu0 %v134
    %967 = vmatpush.xpose.msra.mxu0 %v110
    %968 = vmatpush.xpose.msra.mxu0 %v86
    %969 = vmatmul.f32.gmra.mxu0 %v487
    %v970 = vpop.f32.mrf.mxu0
    %v971 = vadd.f32 %v951, %v970
    %972 = vdwg.mxu0
    %973 = vmatpush.xpose.msra.mxu0 %v447
    %974 = vmatpush.xpose.msra.mxu0 %v423
    %975 = vmatpush.xpose.msra.mxu0 %v399
    %976 = vmatpush.xpose.msra.mxu0 %v375
    %977 = vmatpush.xpose.msra.mxu0 %v351
    %978 = vmatpush.xpose.msra.mxu0 %v327
    %979 = vmatpush.xpose.msra.mxu0 %v303
    %980 = vmatpush.xpose.msra.mxu0 %v279
    %981 = vmatpush.xpose.msra.mxu0 %v255
    %982 = vmatpush.xpose.msra.mxu0 %v231
    %983 = vmatpush.xpose.msra.mxu0 %v207
    %984 = vmatpush.xpose.msra.mxu0 %v183
    %985 = vmatpush.xpose.msra.mxu0 %v159
    %986 = vmatpush.xpose.msra.mxu0 %v135
    %987 = vmatpush.xpose.msra.mxu0 %v111
    %988 = vmatpush.xpose.msra.mxu0 %v87
    %989 = vmatmul.f32.gmra.mxu0 %v488
    %v990 = vpop.f32.mrf.mxu0
    %v991 = vadd.f32 %v971, %v990
    %992 = vdwg.mxu0
    %993 = vst [vmem:[#allocation8] sm:$0x3] %v991
    // Predicated region
    $region26: #{tpu_custom_call.1} parent=1 // pred_check
      _
    $region27: #{tpu_custom_call.1} parent=1 // pred_check_branch
      %995 = sbr.rel (0) target = $region29
    $region28: #{tpu_custom_call.1} parent=1 // pred_region
      %997 = vsyncadd [#allocation4], 0
      %s999 = sshll.u32 [#allocation8], 4
      %s1000 = int_to_ptr.vmem [resolvable:$true] %s999
      %s1001 = sshll.u32 %s3, 4
      %s1002 = int_to_ptr.hbm [resolvable:$true] %s1001
      %1004 = dma.vmem_to_hbm [thread:$0]  %s1000, 32, %s1002, [#allocation4]
    $region29: #{tpu_custom_call.1} parent=1 // pred_fallthru
      _
    // Predicated region
    $region30: #{tpu_custom_call.1} parent=1 // pred_check
      _
    $region31: #{tpu_custom_call.1} parent=1 // pred_check_branch
      %1006 = sbr.rel (0) target = $region33
    $region32: #{tpu_custom_call.1} parent=1 // pred_region
      %1008 = dma.done [#allocation4], 32
    $region33: #{tpu_custom_call.1} parent=1 // pred_fallthru
      _
    %1009 = vsyncpa [#allocation3], 1
    %1010 = vsyncpa [#allocation6], 1
    %1011 = vsyncpa [#allocation4], 1

</llo_original>
